<compile_context>
chip_gen: v7x
topology: tpu7x:2x2x1
jax: 0.10.0
libtpu: 0.0.40
codegen_flags: <defaults>
</compile_context>

<pallas_src>
import jax
import jax.numpy as jnp
from jax.experimental import pallas as pl
from jax.experimental.pallas import tpu as pltpu

HiddenSize = 10
InputSize = 6
NumClasses = 1


def _round_up(n, m):
    return pl.cdiv(n, m) * m


def _vmem_limit_bytes(tb):
    # Rough per-step working set (f32, sublane-padded): x double-buffered
    # (2 x 8 x tb), h / temps (~2 x 16 x tb), output double-buffered (2 x 8 x tb),
    # with 2x headroom.  Clamp to [16 MiB, 48 MiB]: 16 MiB matches v5e's scoped
    # default, 48 MiB leaves headroom inside v7x's 64 MiB physical VMEM.
    need = 4 * tb * (2 * 8 + 2 * 16 + 2 * 8)
    return int(min(48 * 1024 * 1024, max(16 * 1024 * 1024, 2 * need)))


def _mlp_kernel(x_ref, w1_ref, b1_ref, w2_ref, b2_ref, o_ref):
    # x_ref : (InputSize, TB)          batch on lanes (may be f32 or bf16)
    # w1_ref: (HiddenSize, InputSize)  PyTorch fc1.weight layout
    # b1_ref: (HiddenSize, 1)
    # w2_ref: (NumClasses, HiddenSize) PyTorch fc2.weight layout
    # b2_ref: (1, 1) scalar in SMEM
    # o_ref : (NumClasses, TB)
    x = x_ref[...]

    # fc1 on the MXU: (Hidden, Input) @ (Input, TB) -> (Hidden, TB), f32 acc.
    h = jnp.dot(w1_ref[...], x, preferred_element_type=jnp.float32)
    h = h + b1_ref[...]                  # (Hidden, 1) broadcast along lanes
    h = jnp.maximum(h, 0.0)              # ReLU (VPU)

    # fc2 on the MXU: (1, Hidden) @ (Hidden, TB) -> (1, TB); avoids the VPU
    # multiply + cross-sublane (XLU) reduce so compute stays under the x DMA.
    y = jnp.dot(w2_ref[...], h, preferred_element_type=jnp.float32)
    o_ref[...] = (y + b2_ref[0, 0]).astype(o_ref.dtype)


def net_forward_feature_major(x_fm, w1, b1, w2, b2, *, tb=None):
    """Forward pass with x already in feature-major layout.

    x_fm: (InputSize, B)   -- batch on the minor (lane) axis; f32 or bf16
    w1  : (HiddenSize, InputSize), b1: (HiddenSize,)    (PyTorch layouts)
    w2  : (NumClasses, HiddenSize), b2: (NumClasses,)
    returns (NumClasses, B) float32
    """
    assert x_fm.shape[0] == InputSize
    B = x_fm.shape[1]

    if tb is None:
        tb = min(65536, _round_up(B, 128))
        # If a large batch would land in a single tile, split it so the
        # "parallel" grid axis can feed both v7x TensorCores.
        if B > 16384 and pl.cdiv(B, tb) < 2:
            tb = _round_up(pl.cdiv(B, 2), 128)
    tb = min(_round_up(tb, 128), 131072)   # cap working set for v7x VMEM
    grid = (pl.cdiv(B, tb),)               # partial last block handled by Pallas

    # Tiny parameter reshapes/casts (a few hundred bytes; x itself is untouched).
    w1k = w1.astype(jnp.float32)
    b1k = b1.reshape(HiddenSize, 1).astype(jnp.float32)
    w2k = w2.astype(jnp.float32)
    b2k = b2.reshape(1, 1).astype(jnp.float32)

    flops = 2 * B * (InputSize * HiddenSize + HiddenSize * NumClasses)
    bytes_accessed = (
        x_fm.size * x_fm.dtype.itemsize
        + B * NumClasses * 4
        + (w1.size + b1.size + w2.size + b2.size) * 4
    )

    return pl.pallas_call(
        _mlp_kernel,
        out_shape=jax.ShapeDtypeStruct((NumClasses, B), jnp.float32),
        grid=grid,
        in_specs=[
            # x: a new batch tile every grid step (double-buffered by Pallas).
            pl.BlockSpec((InputSize, tb), lambda i: (0, i)),
            # Weights/biases: constant index_map -> DMA'd once, VMEM-resident.
            pl.BlockSpec((HiddenSize, InputSize), lambda i: (0, 0)),
            pl.BlockSpec((HiddenSize, 1), lambda i: (0, 0)),
            pl.BlockSpec((NumClasses, HiddenSize), lambda i: (0, 0)),
            # b2: scalar, lives in SMEM.
            pl.BlockSpec(memory_space=pltpu.MemorySpace.SMEM),
        ],
        out_specs=pl.BlockSpec((NumClasses, tb), lambda i: (0, i)),
        compiler_params=pltpu.CompilerParams(
            dimension_semantics=("parallel",),      # shard tiles across v7x TCs
            vmem_limit_bytes=_vmem_limit_bytes(tb),  # explicit: v5e default is 16 MiB
        ),
        cost_estimate=pl.CostEstimate(
            flops=flops, transcendentals=0, bytes_accessed=bytes_accessed),
    )(x_fm, w1k, b1k, w2k, b2k)


def net_forward(x, w1, b1, w2, b2, *, tb=None):
    """PyTorch-layout API: x (B, InputSize) -> (B, NumClasses).

    NOTE: the x.T below materializes an extra HBM read+write of x (pallas_call
    is a custom call).  Callers that can hold x in (InputSize, B) layout should
    call net_forward_feature_major() directly to avoid that traffic.
    """
    out_fm = net_forward_feature_major(x.T, w1, b1, w2, b2, tb=tb)
    return out_fm.T


def init_params(key):
    """PyTorch nn.Linear-style init: U[-1/sqrt(fan_in), +1/sqrt(fan_in)]."""
    k1, k2, k3, k4 = jax.random.split(key, 4)
    bound1 = 1.0 / jnp.sqrt(jnp.float32(InputSize))
    bound2 = 1.0 / jnp.sqrt(jnp.float32(HiddenSize))
    w1 = jax.random.uniform(k1, (HiddenSize, InputSize), jnp.float32, -bound1, bound1)
    b1 = jax.random.uniform(k2, (HiddenSize,), jnp.float32, -bound1, bound1)
    w2 = jax.random.uniform(k3, (NumClasses, HiddenSize), jnp.float32, -bound2, bound2)
    b2 = jax.random.uniform(k4, (NumClasses,), jnp.float32, -bound2, bound2)
    return w1, b1, w2, b2


if __name__ == "__main__":
    key = jax.random.PRNGKey(0)
    kx, kp = jax.random.split(key)

    # Deliberately NOT a multiple of 128 so the masked partial last block
    # (no-pad / no-slice path) is exercised.
    B = 1000
    x = jax.random.normal(kx, (B, InputSize), jnp.float32)
    w1, b1, w2, b2 = init_params(kp)

    # PyTorch-layout API (matches the module's forward semantics).
    out = jax.block_until_ready(net_forward(x, w1, b1, w2, b2))

    # Pure-JAX reference of the same forward pass (PyTorch weight layouts).
    ref = jnp.maximum(x @ w1.T + b1, 0.0) @ w2.T + b2
    assert out.shape == (B, NumClasses)
    assert jnp.allclose(out, ref, atol=1e-4, rtol=1e-4), float(jnp.max(jnp.abs(out - ref)))

    # Zero-extra-traffic path: caller already holds x feature-major.
    out_fm = jax.block_until_ready(net_forward_feature_major(x.T, w1, b1, w2, b2))
    assert out_fm.shape == (NumClasses, B)
    assert jnp.allclose(out_fm.T, ref, atol=1e-4, rtol=1e-4)

    print("KERNEL_OK")
</pallas_src>

<mosaic_0001>
module attributes {stable_mosaic.version = 11 : i64} {
  func.func @_mlp_kernel(%arg0: i32, %arg1: memref<6x1024xf32, #tpu.memory_space<vmem>>, %arg2: memref<10x6xf32, #tpu.memory_space<vmem>>, %arg3: memref<10x1xf32, #tpu.memory_space<vmem>>, %arg4: memref<1x10xf32, #tpu.memory_space<vmem>>, %arg5: memref<1x1xf32, #tpu.memory_space<smem>>, %arg6: memref<1x1024xf32, #tpu.memory_space<vmem>>) attributes {dimension_semantics = [#tpu.dimension_semantics<parallel>], iteration_bounds = array<i64: 1>, scalar_prefetch = 0 : i64, scratch_operands = 0 : i64, tpu.core_type = #tpu.core_type<tc>, window_params = [{transform_indices = @transform_0, window_bounds = array<i64: 6, 1024>}, {pipeline_mode = #tpu.pipeline_mode<synchronous>, transform_indices = @transform_1, window_bounds = array<i64: 10, 6>}, {pipeline_mode = #tpu.pipeline_mode<synchronous>, transform_indices = @transform_2, window_bounds = array<i64: 10, 1>}, {pipeline_mode = #tpu.pipeline_mode<synchronous>, transform_indices = @transform_3, window_bounds = array<i64: 1, 10>}, {transform_indices = @transform_4, window_bounds = array<i64: 1, 1>}, {transform_indices = @transform_5, window_bounds = array<i64: 1, 1024>}]} {
    %c0 = arith.constant 0 : index
    %c0_0 = arith.constant 0 : index
    %0 = vector.load %arg1[%c0, %c0_0] : memref<6x1024xf32, #tpu.memory_space<vmem>>, vector<6x1024xf32>
    %c0_1 = arith.constant 0 : index
    %c0_2 = arith.constant 0 : index
    %1 = vector.load %arg2[%c0_1, %c0_2] : memref<10x6xf32, #tpu.memory_space<vmem>>, vector<10x6xf32>
    %cst = arith.constant dense<0.000000e+00> : vector<10x1024xf32>
    %2 = tpu.matmul %1, %0, %cst {dimension_numbers = #tpu.dot_dimension_numbers<[1], [0], [0], [1], [0, 0, 1, 1], [], []>} : vector<10x6xf32>, vector<6x1024xf32>, vector<10x1024xf32> -> vector<10x1024xf32>
    %c0_3 = arith.constant 0 : index
    %c0_4 = arith.constant 0 : index
    %3 = vector.load %arg3[%c0_3, %c0_4] : memref<10x1xf32, #tpu.memory_space<vmem>>, vector<10x1xf32>
    %4 = vector.broadcast %3 : vector<10x1xf32> to vector<10x1024xf32>
    %5 = arith.addf %2, %4 : vector<10x1024xf32>
    %cst_5 = arith.constant 0.000000e+00 : f32
    %6 = vector.broadcast %cst_5 : f32 to vector<10x1024xf32>
    %7 = arith.maximumf %5, %6 : vector<10x1024xf32>
    %c0_6 = arith.constant 0 : index
    %c0_7 = arith.constant 0 : index
    %8 = vector.load %arg4[%c0_6, %c0_7] : memref<1x10xf32, #tpu.memory_space<vmem>>, vector<1x10xf32>
    %cst_8 = arith.constant dense<0.000000e+00> : vector<1x1024xf32>
    %9 = tpu.matmul %8, %7, %cst_8 {dimension_numbers = #tpu.dot_dimension_numbers<[1], [0], [0], [1], [0, 0, 1, 1], [], []>} : vector<1x10xf32>, vector<10x1024xf32>, vector<1x1024xf32> -> vector<1x1024xf32>
    %c0_9 = arith.constant 0 : index
    %c0_10 = arith.constant 0 : index
    %10 = memref.load %arg5[%c0_9, %c0_10] : memref<1x1xf32, #tpu.memory_space<smem>>
    %11 = vector.broadcast %10 : f32 to vector<1x1024xf32>
    %12 = arith.addf %9, %11 : vector<1x1024xf32>
    %c0_11 = arith.constant 0 : index
    %c0_12 = arith.constant 0 : index
    %13 = vector.load %arg6[%c0_11, %c0_12] : memref<1x1024xf32, #tpu.memory_space<vmem>>, vector<1x1024xf32>
    tpu.vector_store %arg6[%c0_11, %c0_12], %12 {strides = array<i32>} : memref<1x1024xf32, #tpu.memory_space<vmem>>, vector<1x1024xf32>,
    return
  }
  func.func @transform_0(%arg0: i32) -> (i32, i32) {
    %c0_i32 = arith.constant 0 : i32
    %c0_i32_0 = arith.constant 0 : i32
    return %c0_i32, %arg0 : i32, i32
  }
  func.func @transform_1(%arg0: i32) -> (i32, i32) {
    %c0_i32 = arith.constant 0 : i32
    %c0_i32_0 = arith.constant 0 : i32
    %c0_i32_1 = arith.constant 0 : i32
    return %c0_i32, %c0_i32_0 : i32, i32
  }
  func.func @transform_2(%arg0: i32) -> (i32, i32) {
    %c0_i32 = arith.constant 0 : i32
    %c0_i32_0 = arith.constant 0 : i32
    %c0_i32_1 = arith.constant 0 : i32
    return %c0_i32, %c0_i32_0 : i32, i32
  }
  func.func @transform_3(%arg0: i32) -> (i32, i32) {
    %c0_i32 = arith.constant 0 : i32
    %c0_i32_0 = arith.constant 0 : i32
    %c0_i32_1 = arith.constant 0 : i32
    return %c0_i32, %c0_i32_0 : i32, i32
  }
  func.func @transform_4(%arg0: i32) -> (i32, i32) {
    %c0_i32 = arith.constant 0 : i32
    %c0_i32_0 = arith.constant 0 : i32
    %c0_i32_1 = arith.constant 0 : i32
    return %c0_i32, %c0_i32_0 : i32, i32
  }
  func.func @transform_5(%arg0: i32) -> (i32, i32) {
    %c0_i32 = arith.constant 0 : i32
    %c0_i32_0 = arith.constant 0 : i32
    return %c0_i32, %arg0 : i32, i32
  }
}

</mosaic_0001>

<llo_original>
// kernel: tpu_custom_call.1
$region0: #{tpu_custom_call.1}
  #allocation0 [shape = 'u32[]', space=smem, size = 0x4, offset = 0x4, fixed_abs, tag = 'smem constant byte address 0x4 - core index']
  #allocation1 [shape = 'u32[144,128]{1,0:T(1,128)}', space=vmem, size = 0x12000, scoped, tag = 'internal scratch']
  #allocation2 [shape = 'f32[1,1]{1,0:T(1,128)S(6)}', space=smem, size = 0x200, scoped, tag = 'scoped memory for tpu_custom_call.1']
  %s0 = inlined_call_operand.hbm [shape: f32[6,1000], index: 0, kind: input, shape index: {}]
  %s1 = inlined_call_operand.vmem [shape: f32[10,6], index: 1, kind: input, shape index: {}]
  %s2 = inlined_call_operand.vmem [shape: f32[10,1], index: 2, kind: input, shape index: {}]
  %s3 = inlined_call_operand.vmem [shape: f32[1,10], index: 3, kind: input, shape index: {}]
  %s4 = inlined_call_operand.<no memory space> [shape: f32[1,1], index: 4, kind: input, shape index: {}]
  %s5 = inlined_call_operand.hbm [shape: f32[1,1000], index: 5, kind: output, shape index: {}]
  %s6 = sld [smem:[#allocation0]]
  $region34: #{tpu_custom_call.1} parent=0
    _
  %s8 = ssub.s32 1, %s6
  %s9 = scalar_select 0, %s8, %s6
  %10 = sst [smem:[#allocation2]] %s4
  $region1: #{tpu_custom_call.1} parent=0
    #allocation3 [shape = 'u8[32768]{0}', space=vmem, size = 0x8000, scoped, tag = 'input window, operand 0, single buffered']
    #allocation4 [shape = 's32[1]{0}', space=sflag, size = 0x4, scoped, tag = 'scoped memory for tpu_custom_call.1']
    #allocation5 [shape = 's32[1]{0}', space=sflag, size = 0x4, scoped, tag = 'scoped memory for tpu_custom_call.1']
    #allocation6 [shape = 'u8[4096]{0}', space=vmem, size = 0x1000, scoped, tag = 'output window, operand 0, single buffered']
    %11 = vsyncpa [#allocation4], 0
    %12 = vsyncpa [#allocation5], 0
    // Predicated region
    $region2: #{tpu_custom_call.1} parent=1 // pred_check
      _
    $region3: #{tpu_custom_call.1} parent=1 // pred_check_branch
      %14 = sbr.rel (0) target = $region5
    $region4: #{tpu_custom_call.1} parent=1 // pred_region
      %s16 = ssub.s32 1024, 1024
      %17 = vsyncadd [#allocation4], %s16
      %s19 = sshll.u32 [#allocation3], 4
      %s20 = int_to_ptr.vmem [resolvable:$true] %s19
      %22 = dma.hbm_to_vmem [thread:$0]  %s0, 1024, %s20, [#allocation4]
    $region5: #{tpu_custom_call.1} parent=1 // pred_fallthru
      _
    // Predicated region
    $region6: #{tpu_custom_call.1} parent=1 // pred_check
      _
    $region7: #{tpu_custom_call.1} parent=1 // pred_check_branch
      %24 = sbr.rel (0) target = $region9
    $region8: #{tpu_custom_call.1} parent=1 // pred_region
      _
    $region9: #{tpu_custom_call.1} parent=1 // pred_fallthru
      _
    // Predicated region
    $region10: #{tpu_custom_call.1} parent=1 // pred_check
      _
    $region11: #{tpu_custom_call.1} parent=1 // pred_check_branch
      %26 = sbr.rel (0) target = $region13
    $region12: #{tpu_custom_call.1} parent=1 // pred_region
      _
    $region13: #{tpu_custom_call.1} parent=1 // pred_fallthru
      _
    // Predicated region
    $region14: #{tpu_custom_call.1} parent=1 // pred_check
      _
    $region15: #{tpu_custom_call.1} parent=1 // pred_check_branch
      %28 = sbr.rel (0) target = $region17
    $region16: #{tpu_custom_call.1} parent=1 // pred_region
      _
    $region17: #{tpu_custom_call.1} parent=1 // pred_fallthru
      _
    // Predicated region
    $region18: #{tpu_custom_call.1} parent=1 // pred_check
      _
    $region19: #{tpu_custom_call.1} parent=1 // pred_check_branch
      %30 = sbr.rel (0) target = $region21
    $region20: #{tpu_custom_call.1} parent=1 // pred_region
      _
    $region21: #{tpu_custom_call.1} parent=1 // pred_fallthru
      _
    // Predicated region
    $region22: #{tpu_custom_call.1} parent=1 // pred_check
      _
    $region23: #{tpu_custom_call.1} parent=1 // pred_check_branch
      %32 = sbr.rel (0) target = $region25
    $region24: #{tpu_custom_call.1} parent=1 // pred_region
      %33 = dma.done [#allocation4], 1024
    $region25: #{tpu_custom_call.1} parent=1 // pred_fallthru
      _
    %v34 = vld [vmem:[#allocation3] sm:$0x3f]
    %v35 = vld [vmem:[#allocation3 + $0x8] sm:$0x3f]
    %v36 = vld [vmem:[#allocation3 + $0x10] sm:$0x3f]
    %v37 = vld [vmem:[#allocation3 + $0x18] sm:$0x3f]
    %v38 = vld [vmem:[#allocation3 + $0x20] sm:$0x3f]
    %v39 = vld [vmem:[#allocation3 + $0x28] sm:$0x3f]
    %v40 = vld [vmem:[#allocation3 + $0x30] sm:$0x3f]
    %v41 = vld [vmem:[#allocation3 + $0x38] sm:$0x3f]
    %v42 = vld [vmem:[%s1] sm:$0xff]
    %v43 = vld [vmem:[%s1 + $0x8] sm:$0x3]
    %v44 = vld [vmem:[%s2] sm:$0xff]
    %v45 = vld [vmem:[%s2 + $0x8] sm:$0x3]
    %47 = vset.pattern.permute.xlu0 0
    %48 = vperm.xlu0 %47, %v44
    %v49 = vpop.permute.xlu0 %48
    %52 = vset.pattern.permute.xlu0 0
    %53 = vperm.xlu0 %52, %v45
    %v54 = vpop.permute.xlu0 %53
    %vm56 = vcmask 48128
    %v58 = vsel %vm56, %v42, 0
    %v61 = vsel %vm56, %v43, 0
    %vm63 = vcmask 1045504
    %v65 = vsel %vm63, %v34, 0
    %v68 = vsel %vm63, %v35, 0
    %v71 = vsel %vm63, %v36, 0
    %v74 = vsel %vm63, %v37, 0
    %v77 = vsel %vm63, %v38, 0
    %v80 = vsel %vm63, %v39, 0
    %v83 = vsel %vm63, %v40, 0
    %v86 = vsel %vm63, %v41, 0
    %88 = vmatprep.subr.mxu0 %v68
    %89 = vmatpush1.msra.mxu0 %v65
    %90 = vmatprep.subr.mxu0 0.0
    %91 = vmatpush1.msra.mxu0 0.0
    %92 = vmatprep.subr.mxu0 0.0
    %93 = vmatpush1.msra.mxu0 0.0
    %94 = vmatprep.subr.mxu0 0.0
    %95 = vmatpush1.msra.mxu0 0.0
    %96 = vmatprep.subr.mxu0 0.0
    %97 = vmatpush1.msra.mxu0 0.0
    %98 = vmatprep.subr.mxu0 0.0
    %99 = vmatpush1.msra.mxu0 0.0
    %100 = vmatprep.subr.mxu0 0.0
    %101 = vmatpush1.msra.mxu0 0.0
    %102 = vmatprep.subr.mxu0 0.0
    %103 = vmatpush1.msra.mxu0 0.0
    %104 = vmatprep.subr.mxu0 0.0
    %105 = vmatpush1.msra.mxu0 0.0
    %106 = vmatprep.subr.mxu0 0.0
    %107 = vmatpush1.msra.mxu0 0.0
    %108 = vmatprep.subr.mxu0 0.0
    %109 = vmatpush1.msra.mxu0 0.0
    %110 = vmatprep.subr.mxu0 0.0
    %111 = vmatpush1.msra.mxu0 0.0
    %112 = vmatprep.subr.mxu0 0.0
    %113 = vmatpush1.msra.mxu0 0.0
    %114 = vmatprep.subr.mxu0 0.0
    %115 = vmatpush1.msra.mxu0 0.0
    %116 = vmatprep.subr.mxu0 0.0
    %117 = vmatpush1.msra.mxu0 0.0
    %118 = vmatprep.subr.mxu0 0.0
    %119 = vmatpush1.msra.mxu0 0.0
    %120 = vmatprep.subr.mxu0 0.0
    %121 = vmatpush1.msra.mxu0 0.0
    %122 = vmatprep.subr.mxu0 0.0
    %123 = vmatpush1.msra.mxu0 0.0
    %124 = vmatprep.subr.mxu0 0.0
    %125 = vmatpush1.msra.mxu0 0.0
    %126 = vmatprep.subr.mxu0 0.0
    %127 = vmatpush1.msra.mxu0 0.0
    %128 = vmatprep.subr.mxu0 0.0
    %129 = vmatpush1.msra.mxu0 0.0
    %130 = vmatprep.subr.mxu0 0.0
    %131 = vmatpush1.msra.mxu0 0.0
    %132 = vmatprep.subr.mxu0 0.0
    %133 = vmatpush1.msra.mxu0 0.0
    %134 = vmatprep.subr.mxu0 0.0
    %135 = vmatpush1.msra.mxu0 0.0
    %136 = vmatprep.subr.mxu0 0.0
    %137 = vmatpush1.msra.mxu0 0.0
    %138 = vmatprep.subr.mxu0 0.0
    %139 = vmatpush1.msra.mxu0 0.0
    %140 = vmatprep.subr.mxu0 0.0
    %141 = vmatpush1.msra.mxu0 0.0
    %142 = vmatprep.subr.mxu0 0.0
    %143 = vmatpush1.msra.mxu0 0.0
    %144 = vmatprep.subr.mxu0 0.0
    %145 = vmatpush1.msra.mxu0 0.0
    %146 = vmatprep.subr.mxu0 0.0
    %147 = vmatpush1.msra.mxu0 0.0
    %148 = vmatprep.subr.mxu0 0.0
    %149 = vmatpush1.msra.mxu0 0.0
    %150 = vmatprep.subr.mxu0 0.0
    %151 = vmatpush1.msra.mxu0 0.0
    %152 = vmatprep.mubr.f32.mxu0 0.0
    %153 = vmatmul.mubr.f32.gmra.mrb[0].mxu0 %v58
    %v154 = vpop.f32.mrb[0].mxu0
    %v155 = vadd.f32 %v49, %v154
    %v156 = vpop.f32.mrb[0].mxu0
    %v157 = vadd.f32 %v49, %v156
    %158 = vmatprep.mubr.f32.mxu0 0.0
    %159 = vmatmul.mubr.f32.gmra.mrb[0].mxu0 %v61
    %v160 = vpop.f32.mrb[0].mxu0
    %v161 = vadd.f32 %v54, %v160
    %v162 = vpop.f32.mrb[0].mxu0
    %v163 = vadd.f32 %v54, %v162
    %164 = vdwg.mxu0
    %165 = vmatprep.subr.mxu0 %v74
    %166 = vmatpush1.msra.mxu0 %v71
    %167 = vmatprep.subr.mxu0 0.0
    %168 = vmatpush1.msra.mxu0 0.0
    %169 = vmatprep.subr.mxu0 0.0
    %170 = vmatpush1.msra.mxu0 0.0
    %171 = vmatprep.subr.mxu0 0.0
    %172 = vmatpush1.msra.mxu0 0.0
    %173 = vmatprep.subr.mxu0 0.0
    %174 = vmatpush1.msra.mxu0 0.0
    %175 = vmatprep.subr.mxu0 0.0
    %176 = vmatpush1.msra.mxu0 0.0
    %177 = vmatprep.subr.mxu0 0.0
    %178 = vmatpush1.msra.mxu0 0.0
    %179 = vmatprep.subr.mxu0 0.0
    %180 = vmatpush1.msra.mxu0 0.0
    %181 = vmatprep.subr.mxu0 0.0
    %182 = vmatpush1.msra.mxu0 0.0
    %183 = vmatprep.subr.mxu0 0.0
    %184 = vmatpush1.msra.mxu0 0.0
    %185 = vmatprep.subr.mxu0 0.0
    %186 = vmatpush1.msra.mxu0 0.0
    %187 = vmatprep.subr.mxu0 0.0
    %188 = vmatpush1.msra.mxu0 0.0
    %189 = vmatprep.subr.mxu0 0.0
    %190 = vmatpush1.msra.mxu0 0.0
    %191 = vmatprep.subr.mxu0 0.0
    %192 = vmatpush1.msra.mxu0 0.0
    %193 = vmatprep.subr.mxu0 0.0
    %194 = vmatpush1.msra.mxu0 0.0
    %195 = vmatprep.subr.mxu0 0.0
    %196 = vmatpush1.msra.mxu0 0.0
    %197 = vmatprep.subr.mxu0 0.0
    %198 = vmatpush1.msra.mxu0 0.0
    %199 = vmatprep.subr.mxu0 0.0
    %200 = vmatpush1.msra.mxu0 0.0
    %201 = vmatprep.subr.mxu0 0.0
    %202 = vmatpush1.msra.mxu0 0.0
    %203 = vmatprep.subr.mxu0 0.0
    %204 = vmatpush1.msra.mxu0 0.0
    %205 = vmatprep.subr.mxu0 0.0
    %206 = vmatpush1.msra.mxu0 0.0
    %207 = vmatprep.subr.mxu0 0.0
    %208 = vmatpush1.msra.mxu0 0.0
    %209 = vmatprep.subr.mxu0 0.0
    %210 = vmatpush1.msra.mxu0 0.0
    %211 = vmatprep.subr.mxu0 0.0
    %212 = vmatpush1.msra.mxu0 0.0
    %213 = vmatprep.subr.mxu0 0.0
    %214 = vmatpush1.msra.mxu0 0.0
    %215 = vmatprep.subr.mxu0 0.0
    %216 = vmatpush1.msra.mxu0 0.0
    %217 = vmatprep.subr.mxu0 0.0
    %218 = vmatpush1.msra.mxu0 0.0
    %219 = vmatprep.subr.mxu0 0.0
    %220 = vmatpush1.msra.mxu0 0.0
    %221 = vmatprep.subr.mxu0 0.0
    %222 = vmatpush1.msra.mxu0 0.0
    %223 = vmatprep.subr.mxu0 0.0
    %224 = vmatpush1.msra.mxu0 0.0
    %225 = vmatprep.subr.mxu0 0.0
    %226 = vmatpush1.msra.mxu0 0.0
    %227 = vmatprep.subr.mxu0 0.0
    %228 = vmatpush1.msra.mxu0 0.0
    %229 = vmatprep.mubr.f32.mxu0 0.0
    %230 = vmatmul.mubr.f32.gmra.mrb[0].mxu0 %v58
    %v231 = vpop.f32.mrb[0].mxu0
    %v232 = vadd.f32 %v49, %v231
    %v233 = vpop.f32.mrb[0].mxu0
    %v234 = vadd.f32 %v49, %v233
    %235 = vmatprep.mubr.f32.mxu0 0.0
    %236 = vmatmul.mubr.f32.gmra.mrb[0].mxu0 %v61
    %v237 = vpop.f32.mrb[0].mxu0
    %v238 = vadd.f32 %v54, %v237
    %v239 = vpop.f32.mrb[0].mxu0
    %v240 = vadd.f32 %v54, %v239
    %241 = vdwg.mxu0
    %242 = vmatprep.subr.mxu0 %v80
    %243 = vmatpush1.msra.mxu0 %v77
    %244 = vmatprep.subr.mxu0 0.0
    %245 = vmatpush1.msra.mxu0 0.0
    %246 = vmatprep.subr.mxu0 0.0
    %247 = vmatpush1.msra.mxu0 0.0
    %248 = vmatprep.subr.mxu0 0.0
    %249 = vmatpush1.msra.mxu0 0.0
    %250 = vmatprep.subr.mxu0 0.0
    %251 = vmatpush1.msra.mxu0 0.0
    %252 = vmatprep.subr.mxu0 0.0
    %253 = vmatpush1.msra.mxu0 0.0
    %254 = vmatprep.subr.mxu0 0.0
    %255 = vmatpush1.msra.mxu0 0.0
    %256 = vmatprep.subr.mxu0 0.0
    %257 = vmatpush1.msra.mxu0 0.0
    %258 = vmatprep.subr.mxu0 0.0
    %259 = vmatpush1.msra.mxu0 0.0
    %260 = vmatprep.subr.mxu0 0.0
    %261 = vmatpush1.msra.mxu0 0.0
    %262 = vmatprep.subr.mxu0 0.0
    %263 = vmatpush1.msra.mxu0 0.0
    %264 = vmatprep.subr.mxu0 0.0
    %265 = vmatpush1.msra.mxu0 0.0
    %266 = vmatprep.subr.mxu0 0.0
    %267 = vmatpush1.msra.mxu0 0.0
    %268 = vmatprep.subr.mxu0 0.0
    %269 = vmatpush1.msra.mxu0 0.0
    %270 = vmatprep.subr.mxu0 0.0
    %271 = vmatpush1.msra.mxu0 0.0
    %272 = vmatprep.subr.mxu0 0.0
    %273 = vmatpush1.msra.mxu0 0.0
    %274 = vmatprep.subr.mxu0 0.0
    %275 = vmatpush1.msra.mxu0 0.0
    %276 = vmatprep.subr.mxu0 0.0
    %277 = vmatpush1.msra.mxu0 0.0
    %278 = vmatprep.subr.mxu0 0.0
    %279 = vmatpush1.msra.mxu0 0.0
    %280 = vmatprep.subr.mxu0 0.0
    %281 = vmatpush1.msra.mxu0 0.0
    %282 = vmatprep.subr.mxu0 0.0
    %283 = vmatpush1.msra.mxu0 0.0
    %284 = vmatprep.subr.mxu0 0.0
    %285 = vmatpush1.msra.mxu0 0.0
    %286 = vmatprep.subr.mxu0 0.0
    %287 = vmatpush1.msra.mxu0 0.0
    %288 = vmatprep.subr.mxu0 0.0
    %289 = vmatpush1.msra.mxu0 0.0
    %290 = vmatprep.subr.mxu0 0.0
    %291 = vmatpush1.msra.mxu0 0.0
    %292 = vmatprep.subr.mxu0 0.0
    %293 = vmatpush1.msra.mxu0 0.0
    %294 = vmatprep.subr.mxu0 0.0
    %295 = vmatpush1.msra.mxu0 0.0
    %296 = vmatprep.subr.mxu0 0.0
    %297 = vmatpush1.msra.mxu0 0.0
    %298 = vmatprep.subr.mxu0 0.0
    %299 = vmatpush1.msra.mxu0 0.0
    %300 = vmatprep.subr.mxu0 0.0
    %301 = vmatpush1.msra.mxu0 0.0
    %302 = vmatprep.subr.mxu0 0.0
    %303 = vmatpush1.msra.mxu0 0.0
    %304 = vmatprep.subr.mxu0 0.0
    %305 = vmatpush1.msra.mxu0 0.0
    %306 = vmatprep.mubr.f32.mxu0 0.0
    %307 = vmatmul.mubr.f32.gmra.mrb[0].mxu0 %v58
    %v308 = vpop.f32.mrb[0].mxu0
    %v309 = vadd.f32 %v49, %v308
    %v310 = vpop.f32.mrb[0].mxu0
    %v311 = vadd.f32 %v49, %v310
    %312 = vmatprep.mubr.f32.mxu0 0.0
    %313 = vmatmul.mubr.f32.gmra.mrb[0].mxu0 %v61
    %v314 = vpop.f32.mrb[0].mxu0
    %v315 = vadd.f32 %v54, %v314
    %v316 = vpop.f32.mrb[0].mxu0
    %v317 = vadd.f32 %v54, %v316
    %318 = vdwg.mxu0
    %319 = vmatprep.subr.mxu0 %v86
    %320 = vmatpush1.msra.mxu0 %v83
    %321 = vmatprep.subr.mxu0 0.0
    %322 = vmatpush1.msra.mxu0 0.0
    %323 = vmatprep.subr.mxu0 0.0
    %324 = vmatpush1.msra.mxu0 0.0
    %325 = vmatprep.subr.mxu0 0.0
    %326 = vmatpush1.msra.mxu0 0.0
    %327 = vmatprep.subr.mxu0 0.0
    %328 = vmatpush1.msra.mxu0 0.0
    %329 = vmatprep.subr.mxu0 0.0
    %330 = vmatpush1.msra.mxu0 0.0
    %331 = vmatprep.subr.mxu0 0.0
    %332 = vmatpush1.msra.mxu0 0.0
    %333 = vmatprep.subr.mxu0 0.0
    %334 = vmatpush1.msra.mxu0 0.0
    %335 = vmatprep.subr.mxu0 0.0
    %336 = vmatpush1.msra.mxu0 0.0
    %337 = vmatprep.subr.mxu0 0.0
    %338 = vmatpush1.msra.mxu0 0.0
    %339 = vmatprep.subr.mxu0 0.0
    %340 = vmatpush1.msra.mxu0 0.0
    %341 = vmatprep.subr.mxu0 0.0
    %342 = vmatpush1.msra.mxu0 0.0
    %343 = vmatprep.subr.mxu0 0.0
    %344 = vmatpush1.msra.mxu0 0.0
    %345 = vmatprep.subr.mxu0 0.0
    %346 = vmatpush1.msra.mxu0 0.0
    %347 = vmatprep.subr.mxu0 0.0
    %348 = vmatpush1.msra.mxu0 0.0
    %349 = vmatprep.subr.mxu0 0.0
    %350 = vmatpush1.msra.mxu0 0.0
    %351 = vmatprep.subr.mxu0 0.0
    %352 = vmatpush1.msra.mxu0 0.0
    %353 = vmatprep.subr.mxu0 0.0
    %354 = vmatpush1.msra.mxu0 0.0
    %355 = vmatprep.subr.mxu0 0.0
    %356 = vmatpush1.msra.mxu0 0.0
    %357 = vmatprep.subr.mxu0 0.0
    %358 = vmatpush1.msra.mxu0 0.0
    %359 = vmatprep.subr.mxu0 0.0
    %360 = vmatpush1.msra.mxu0 0.0
    %361 = vmatprep.subr.mxu0 0.0
    %362 = vmatpush1.msra.mxu0 0.0
    %363 = vmatprep.subr.mxu0 0.0
    %364 = vmatpush1.msra.mxu0 0.0
    %365 = vmatprep.subr.mxu0 0.0
    %366 = vmatpush1.msra.mxu0 0.0
    %367 = vmatprep.subr.mxu0 0.0
    %368 = vmatpush1.msra.mxu0 0.0
    %369 = vmatprep.subr.mxu0 0.0
    %370 = vmatpush1.msra.mxu0 0.0
    %371 = vmatprep.subr.mxu0 0.0
    %372 = vmatpush1.msra.mxu0 0.0
    %373 = vmatprep.subr.mxu0 0.0
    %374 = vmatpush1.msra.mxu0 0.0
    %375 = vmatprep.subr.mxu0 0.0
    %376 = vmatpush1.msra.mxu0 0.0
    %377 = vmatprep.subr.mxu0 0.0
    %378 = vmatpush1.msra.mxu0 0.0
    %379 = vmatprep.subr.mxu0 0.0
    %380 = vmatpush1.msra.mxu0 0.0
    %381 = vmatprep.subr.mxu0 0.0
    %382 = vmatpush1.msra.mxu0 0.0
    %383 = vmatprep.mubr.f32.mxu0 0.0
    %384 = vmatmul.mubr.f32.gmra.mrb[0].mxu0 %v58
    %v385 = vpop.f32.mrb[0].mxu0
    %v386 = vadd.f32 %v49, %v385
    %v387 = vpop.f32.mrb[0].mxu0
    %v388 = vadd.f32 %v49, %v387
    %389 = vmatprep.mubr.f32.mxu0 0.0
    %390 = vmatmul.mubr.f32.gmra.mrb[0].mxu0 %v61
    %v391 = vpop.f32.mrb[0].mxu0
    %v392 = vadd.f32 %v54, %v391
    %v393 = vpop.f32.mrb[0].mxu0
    %v394 = vadd.f32 %v54, %v393
    %395 = vdwg.mxu0
    %v396 = vmax.f32 %v155, 0.0
    %v397 = vmax.f32 %v157, 0.0
    %v398 = vmax.f32 %v232, 0.0
    %v399 = vmax.f32 %v234, 0.0
    %v400 = vmax.f32 %v309, 0.0
    %v401 = vmax.f32 %v311, 0.0
    %v402 = vmax.f32 %v386, 0.0
    %v403 = vmax.f32 %v388, 0.0
    %v404 = vmax.f32 %v161, 0.0
    %v405 = vmax.f32 %v163, 0.0
    %v406 = vmax.f32 %v238, 0.0
    %v407 = vmax.f32 %v240, 0.0
    %v408 = vmax.f32 %v315, 0.0
    %v409 = vmax.f32 %v317, 0.0
    %v410 = vmax.f32 %v392, 0.0
    %v411 = vmax.f32 %v394, 0.0
    %v412 = vld [vmem:[%s3] sm:$0x1]
    %s413 = sld [smem:[#allocation2]]
    %v414 = vstv %s413
    %vm415 = vcmask 80896
    %v417 = vsel %vm415, %v412, 0
    %vm419 = vcmask 1041408
    %v421 = vsel %vm419, %v404, 0
    %v424 = vsel %vm419, %v405, 0
    %v427 = vsel %vm419, %v406, 0
    %v430 = vsel %vm419, %v407, 0
    %v433 = vsel %vm419, %v408, 0
    %v436 = vsel %vm419, %v409, 0
    %v439 = vsel %vm419, %v410, 0
    %v442 = vsel %vm419, %v411, 0
    %444 = vmatprep.subr.mxu0 %v397
    %445 = vmatpush1.msra.mxu0 %v396
    %446 = vmatprep.subr.mxu0 %v424
    %447 = vmatpush1.msra.mxu0 %v421
    %448 = vmatprep.subr.mxu0 0.0
    %449 = vmatpush1.msra.mxu0 0.0
    %450 = vmatprep.subr.mxu0 0.0
    %451 = vmatpush1.msra.mxu0 0.0
    %452 = vmatprep.subr.mxu0 0.0
    %453 = vmatpush1.msra.mxu0 0.0
    %454 = vmatprep.subr.mxu0 0.0
    %455 = vmatpush1.msra.mxu0 0.0
    %456 = vmatprep.subr.mxu0 0.0
    %457 = vmatpush1.msra.mxu0 0.0
    %458 = vmatprep.subr.mxu0 0.0
    %459 = vmatpush1.msra.mxu0 0.0
    %460 = vmatprep.subr.mxu0 0.0
    %461 = vmatpush1.msra.mxu0 0.0
    %462 = vmatprep.subr.mxu0 0.0
    %463 = vmatpush1.msra.mxu0 0.0
    %464 = vmatprep.subr.mxu0 0.0
    %465 = vmatpush1.msra.mxu0 0.0
    %466 = vmatprep.subr.mxu0 0.0
    %467 = vmatpush1.msra.mxu0 0.0
    %468 = vmatprep.subr.mxu0 0.0
    %469 = vmatpush1.msra.mxu0 0.0
    %470 = vmatprep.subr.mxu0 0.0
    %471 = vmatpush1.msra.mxu0 0.0
    %472 = vmatprep.subr.mxu0 0.0
    %473 = vmatpush1.msra.mxu0 0.0
    %474 = vmatprep.subr.mxu0 0.0
    %475 = vmatpush1.msra.mxu0 0.0
    %476 = vmatprep.subr.mxu0 0.0
    %477 = vmatpush1.msra.mxu0 0.0
    %478 = vmatprep.subr.mxu0 0.0
    %479 = vmatpush1.msra.mxu0 0.0
    %480 = vmatprep.subr.mxu0 0.0
    %481 = vmatpush1.msra.mxu0 0.0
    %482 = vmatprep.subr.mxu0 0.0
    %483 = vmatpush1.msra.mxu0 0.0
    %484 = vmatprep.subr.mxu0 0.0
    %485 = vmatpush1.msra.mxu0 0.0
    %486 = vmatprep.subr.mxu0 0.0
    %487 = vmatpush1.msra.mxu0 0.0
    %488 = vmatprep.subr.mxu0 0.0
    %489 = vmatpush1.msra.mxu0 0.0
    %490 = vmatprep.subr.mxu0 0.0
    %491 = vmatpush1.msra.mxu0 0.0
    %492 = vmatprep.subr.mxu0 0.0
    %493 = vmatpush1.msra.mxu0 0.0
    %494 = vmatprep.subr.mxu0 0.0
    %495 = vmatpush1.msra.mxu0 0.0
    %496 = vmatprep.subr.mxu0 0.0
    %497 = vmatpush1.msra.mxu0 0.0
    %498 = vmatprep.subr.mxu0 0.0
    %499 = vmatpush1.msra.mxu0 0.0
    %500 = vmatprep.subr.mxu0 0.0
    %501 = vmatpush1.msra.mxu0 0.0
    %502 = vmatprep.subr.mxu0 0.0
    %503 = vmatpush1.msra.mxu0 0.0
    %504 = vmatprep.subr.mxu0 0.0
    %505 = vmatpush1.msra.mxu0 0.0
    %506 = vmatprep.subr.mxu0 0.0
    %507 = vmatpush1.msra.mxu0 0.0
    %508 = vmatprep.mubr.f32.mxu0 0.0
    %509 = vmatmul.mubr.f32.gmra.mrb[0].mxu0 %v417
    %v510 = vpop.f32.mrb[0].mxu0
    %v511 = vadd.f32 %v414, %v510
    %v512 = vpop.f32.mrb[0].mxu0
    %v513 = vadd.f32 %v414, %v512
    %514 = vdwg.mxu0
    %515 = vmatprep.subr.mxu0 %v399
    %516 = vmatpush1.msra.mxu0 %v398
    %517 = vmatprep.subr.mxu0 %v430
    %518 = vmatpush1.msra.mxu0 %v427
    %519 = vmatprep.subr.mxu0 0.0
    %520 = vmatpush1.msra.mxu0 0.0
    %521 = vmatprep.subr.mxu0 0.0
    %522 = vmatpush1.msra.mxu0 0.0
    %523 = vmatprep.subr.mxu0 0.0
    %524 = vmatpush1.msra.mxu0 0.0
    %525 = vmatprep.subr.mxu0 0.0
    %526 = vmatpush1.msra.mxu0 0.0
    %527 = vmatprep.subr.mxu0 0.0
    %528 = vmatpush1.msra.mxu0 0.0
    %529 = vmatprep.subr.mxu0 0.0
    %530 = vmatpush1.msra.mxu0 0.0
    %531 = vmatprep.subr.mxu0 0.0
    %532 = vmatpush1.msra.mxu0 0.0
    %533 = vmatprep.subr.mxu0 0.0
    %534 = vmatpush1.msra.mxu0 0.0
    %535 = vmatprep.subr.mxu0 0.0
    %536 = vmatpush1.msra.mxu0 0.0
    %537 = vmatprep.subr.mxu0 0.0
    %538 = vmatpush1.msra.mxu0 0.0
    %539 = vmatprep.subr.mxu0 0.0
    %540 = vmatpush1.msra.mxu0 0.0
    %541 = vmatprep.subr.mxu0 0.0
    %542 = vmatpush1.msra.mxu0 0.0
    %543 = vmatprep.subr.mxu0 0.0
    %544 = vmatpush1.msra.mxu0 0.0
    %545 = vmatprep.subr.mxu0 0.0
    %546 = vmatpush1.msra.mxu0 0.0
    %547 = vmatprep.subr.mxu0 0.0
    %548 = vmatpush1.msra.mxu0 0.0
    %549 = vmatprep.subr.mxu0 0.0
    %550 = vmatpush1.msra.mxu0 0.0
    %551 = vmatprep.subr.mxu0 0.0
    %552 = vmatpush1.msra.mxu0 0.0
    %553 = vmatprep.subr.mxu0 0.0
    %554 = vmatpush1.msra.mxu0 0.0
    %555 = vmatprep.subr.mxu0 0.0
    %556 = vmatpush1.msra.mxu0 0.0
    %557 = vmatprep.subr.mxu0 0.0
    %558 = vmatpush1.msra.mxu0 0.0
    %559 = vmatprep.subr.mxu0 0.0
    %560 = vmatpush1.msra.mxu0 0.0
    %561 = vmatprep.subr.mxu0 0.0
    %562 = vmatpush1.msra.mxu0 0.0
    %563 = vmatprep.subr.mxu0 0.0
    %564 = vmatpush1.msra.mxu0 0.0
    %565 = vmatprep.subr.mxu0 0.0
    %566 = vmatpush1.msra.mxu0 0.0
    %567 = vmatprep.subr.mxu0 0.0
    %568 = vmatpush1.msra.mxu0 0.0
    %569 = vmatprep.subr.mxu0 0.0
    %570 = vmatpush1.msra.mxu0 0.0
    %571 = vmatprep.subr.mxu0 0.0
    %572 = vmatpush1.msra.mxu0 0.0
    %573 = vmatprep.subr.mxu0 0.0
    %574 = vmatpush1.msra.mxu0 0.0
    %575 = vmatprep.subr.mxu0 0.0
    %576 = vmatpush1.msra.mxu0 0.0
    %577 = vmatprep.subr.mxu0 0.0
    %578 = vmatpush1.msra.mxu0 0.0
    %579 = vmatprep.mubr.f32.mxu0 0.0
    %580 = vmatmul.mubr.f32.gmra.mrb[0].mxu0 %v417
    %v581 = vpop.f32.mrb[0].mxu0
    %v582 = vadd.f32 %v414, %v581
    %v583 = vpop.f32.mrb[0].mxu0
    %v584 = vadd.f32 %v414, %v583
    %585 = vdwg.mxu0
    %586 = vmatprep.subr.mxu0 %v401
    %587 = vmatpush1.msra.mxu0 %v400
    %588 = vmatprep.subr.mxu0 %v436
    %589 = vmatpush1.msra.mxu0 %v433
    %590 = vmatprep.subr.mxu0 0.0
    %591 = vmatpush1.msra.mxu0 0.0
    %592 = vmatprep.subr.mxu0 0.0
    %593 = vmatpush1.msra.mxu0 0.0
    %594 = vmatprep.subr.mxu0 0.0
    %595 = vmatpush1.msra.mxu0 0.0
    %596 = vmatprep.subr.mxu0 0.0
    %597 = vmatpush1.msra.mxu0 0.0
    %598 = vmatprep.subr.mxu0 0.0
    %599 = vmatpush1.msra.mxu0 0.0
    %600 = vmatprep.subr.mxu0 0.0
    %601 = vmatpush1.msra.mxu0 0.0
    %602 = vmatprep.subr.mxu0 0.0
    %603 = vmatpush1.msra.mxu0 0.0
    %604 = vmatprep.subr.mxu0 0.0
    %605 = vmatpush1.msra.mxu0 0.0
    %606 = vmatprep.subr.mxu0 0.0
    %607 = vmatpush1.msra.mxu0 0.0
    %608 = vmatprep.subr.mxu0 0.0
    %609 = vmatpush1.msra.mxu0 0.0
    %610 = vmatprep.subr.mxu0 0.0
    %611 = vmatpush1.msra.mxu0 0.0
    %612 = vmatprep.subr.mxu0 0.0
    %613 = vmatpush1.msra.mxu0 0.0
    %614 = vmatprep.subr.mxu0 0.0
    %615 = vmatpush1.msra.mxu0 0.0
    %616 = vmatprep.subr.mxu0 0.0
    %617 = vmatpush1.msra.mxu0 0.0
    %618 = vmatprep.subr.mxu0 0.0
    %619 = vmatpush1.msra.mxu0 0.0
    %620 = vmatprep.subr.mxu0 0.0
    %621 = vmatpush1.msra.mxu0 0.0
    %622 = vmatprep.subr.mxu0 0.0
    %623 = vmatpush1.msra.mxu0 0.0
    %624 = vmatprep.subr.mxu0 0.0
    %625 = vmatpush1.msra.mxu0 0.0
    %626 = vmatprep.subr.mxu0 0.0
    %627 = vmatpush1.msra.mxu0 0.0
    %628 = vmatprep.subr.mxu0 0.0
    %629 = vmatpush1.msra.mxu0 0.0
    %630 = vmatprep.subr.mxu0 0.0
    %631 = vmatpush1.msra.mxu0 0.0
    %632 = vmatprep.subr.mxu0 0.0
    %633 = vmatpush1.msra.mxu0 0.0
    %634 = vmatprep.subr.mxu0 0.0
    %635 = vmatpush1.msra.mxu0 0.0
    %636 = vmatprep.subr.mxu0 0.0
    %637 = vmatpush1.msra.mxu0 0.0
    %638 = vmatprep.subr.mxu0 0.0
    %639 = vmatpush1.msra.mxu0 0.0
    %640 = vmatprep.subr.mxu0 0.0
    %641 = vmatpush1.msra.mxu0 0.0
    %642 = vmatprep.subr.mxu0 0.0
    %643 = vmatpush1.msra.mxu0 0.0
    %644 = vmatprep.subr.mxu0 0.0
    %645 = vmatpush1.msra.mxu0 0.0
    %646 = vmatprep.subr.mxu0 0.0
    %647 = vmatpush1.msra.mxu0 0.0
    %648 = vmatprep.subr.mxu0 0.0
    %649 = vmatpush1.msra.mxu0 0.0
    %650 = vmatprep.mubr.f32.mxu0 0.0
    %651 = vmatmul.mubr.f32.gmra.mrb[0].mxu0 %v417
    %v652 = vpop.f32.mrb[0].mxu0
    %v653 = vadd.f32 %v414, %v652
    %v654 = vpop.f32.mrb[0].mxu0
    %v655 = vadd.f32 %v414, %v654
    %656 = vdwg.mxu0
    %657 = vmatprep.subr.mxu0 %v403
    %658 = vmatpush1.msra.mxu0 %v402
    %659 = vmatprep.subr.mxu0 %v442
    %660 = vmatpush1.msra.mxu0 %v439
    %661 = vmatprep.subr.mxu0 0.0
    %662 = vmatpush1.msra.mxu0 0.0
    %663 = vmatprep.subr.mxu0 0.0
    %664 = vmatpush1.msra.mxu0 0.0
    %665 = vmatprep.subr.mxu0 0.0
    %666 = vmatpush1.msra.mxu0 0.0
    %667 = vmatprep.subr.mxu0 0.0
    %668 = vmatpush1.msra.mxu0 0.0
    %669 = vmatprep.subr.mxu0 0.0
    %670 = vmatpush1.msra.mxu0 0.0
    %671 = vmatprep.subr.mxu0 0.0
    %672 = vmatpush1.msra.mxu0 0.0
    %673 = vmatprep.subr.mxu0 0.0
    %674 = vmatpush1.msra.mxu0 0.0
    %675 = vmatprep.subr.mxu0 0.0
    %676 = vmatpush1.msra.mxu0 0.0
    %677 = vmatprep.subr.mxu0 0.0
    %678 = vmatpush1.msra.mxu0 0.0
    %679 = vmatprep.subr.mxu0 0.0
    %680 = vmatpush1.msra.mxu0 0.0
    %681 = vmatprep.subr.mxu0 0.0
    %682 = vmatpush1.msra.mxu0 0.0
    %683 = vmatprep.subr.mxu0 0.0
    %684 = vmatpush1.msra.mxu0 0.0
    %685 = vmatprep.subr.mxu0 0.0
    %686 = vmatpush1.msra.mxu0 0.0
    %687 = vmatprep.subr.mxu0 0.0
    %688 = vmatpush1.msra.mxu0 0.0
    %689 = vmatprep.subr.mxu0 0.0
    %690 = vmatpush1.msra.mxu0 0.0
    %691 = vmatprep.subr.mxu0 0.0
    %692 = vmatpush1.msra.mxu0 0.0
    %693 = vmatprep.subr.mxu0 0.0
    %694 = vmatpush1.msra.mxu0 0.0
    %695 = vmatprep.subr.mxu0 0.0
    %696 = vmatpush1.msra.mxu0 0.0
    %697 = vmatprep.subr.mxu0 0.0
    %698 = vmatpush1.msra.mxu0 0.0
    %699 = vmatprep.subr.mxu0 0.0
    %700 = vmatpush1.msra.mxu0 0.0
    %701 = vmatprep.subr.mxu0 0.0
    %702 = vmatpush1.msra.mxu0 0.0
    %703 = vmatprep.subr.mxu0 0.0
    %704 = vmatpush1.msra.mxu0 0.0
    %705 = vmatprep.subr.mxu0 0.0
    %706 = vmatpush1.msra.mxu0 0.0
    %707 = vmatprep.subr.mxu0 0.0
    %708 = vmatpush1.msra.mxu0 0.0
    %709 = vmatprep.subr.mxu0 0.0
    %710 = vmatpush1.msra.mxu0 0.0
    %711 = vmatprep.subr.mxu0 0.0
    %712 = vmatpush1.msra.mxu0 0.0
    %713 = vmatprep.subr.mxu0 0.0
    %714 = vmatpush1.msra.mxu0 0.0
    %715 = vmatprep.subr.mxu0 0.0
    %716 = vmatpush1.msra.mxu0 0.0
    %717 = vmatprep.subr.mxu0 0.0
    %718 = vmatpush1.msra.mxu0 0.0
    %719 = vmatprep.subr.mxu0 0.0
    %720 = vmatpush1.msra.mxu0 0.0
    %721 = vmatprep.mubr.f32.mxu0 0.0
    %722 = vmatmul.mubr.f32.gmra.mrb[0].mxu0 %v417
    %v723 = vpop.f32.mrb[0].mxu0
    %v724 = vadd.f32 %v414, %v723
    %v725 = vpop.f32.mrb[0].mxu0
    %v726 = vadd.f32 %v414, %v725
    %727 = vdwg.mxu0
    %v736 = vcombine.low %v511, %v513
    %v737 = vcombine.low %v582, %v584
    %v738 = vcombine.low %v653, %v655
    %v739 = vcombine.low %v724, %v726
    %v741 = vunpack.c.l.s4 1966171168
    %v742 = vunpack.c.0.s8 %v741
    %v743 = vlaneseq
    %v744 = vshrl.u32 %v743, 7
    %v745 = vsub.s32 %v742, %v744
    %v746 = vrot.slane %v736, %v745
    %v748 = vunpack.c.l.s4 1966171168
    %v749 = vunpack.c.0.s8 %v748
    %v750 = vlaneseq
    %v751 = vshrl.u32 %v750, 7
    %v752 = vsub.s32 %v749, %v751
    %v753 = vrot.slane %v737, %v752
    %v755 = vunpack.c.l.s4 1966171168
    %v756 = vunpack.c.0.s8 %v755
    %v757 = vlaneseq
    %v758 = vshrl.u32 %v757, 7
    %v759 = vsub.s32 %v756, %v758
    %v760 = vrot.slane %v738, %v759
    %v762 = vunpack.c.l.s4 1966171168
    %v763 = vunpack.c.0.s8 %v762
    %v764 = vlaneseq
    %v765 = vshrl.u32 %v764, 7
    %v766 = vsub.s32 %v763, %v765
    %v767 = vrot.slane %v739, %v766
    %v768 = vcombine.low %v746, %v753
    %v769 = vcombine.low %v760, %v767
    %v771 = vunpack.c.l.s4 1966171168
    %v772 = vunpack.c.0.s8 %v771
    %v773 = vlaneseq
    %v774 = vshrl.u32 %v773, 7
    %v775 = vsub.s32 %v772, %v774
    %v776 = vrot.slane %v768, %v775
    %v778 = vunpack.c.l.s4 1966171168
    %v779 = vunpack.c.0.s8 %v778
    %v780 = vlaneseq
    %v781 = vshrl.u32 %v780, 7
    %v782 = vsub.s32 %v779, %v781
    %v783 = vrot.slane %v769, %v782
    %v784 = vcombine.low %v776, %v783
    %786 = vst [vmem:[#allocation6] sm:$0xff] %v784
    // Predicated region
    $region26: #{tpu_custom_call.1} parent=1 // pred_check
      _
    $region27: #{tpu_custom_call.1} parent=1 // pred_check_branch
      %788 = sbr.rel (0) target = $region29
    $region28: #{tpu_custom_call.1} parent=1 // pred_region
      %s790 = ssub.s32 128, 128
      %791 = vsyncadd [#allocation5], %s790
      %s793 = sshll.u32 [#allocation6], 4
      %s794 = int_to_ptr.vmem [resolvable:$true] %s793
      %796 = dma.vmem_to_hbm [thread:$0]  %s794, 128, %s5, [#allocation5]
    $region29: #{tpu_custom_call.1} parent=1 // pred_fallthru
      _
    // Predicated region
    $region30: #{tpu_custom_call.1} parent=1 // pred_check
      _
    $region31: #{tpu_custom_call.1} parent=1 // pred_check_branch
      %798 = sbr.rel (0) target = $region33
    $region32: #{tpu_custom_call.1} parent=1 // pred_region
      %799 = dma.done [#allocation5], 128
    $region33: #{tpu_custom_call.1} parent=1 // pred_fallthru
      _
    %800 = vsyncpa [#allocation4], 1
    %801 = vsyncpa [#allocation5], 1

</llo_original>
